<compile_context>
chip_gen: v5e
topology: v5e:2x2
jax: 0.10.0
libtpu: 0.0.40
codegen_flags: <defaults>
</compile_context>

<pallas_src>
import functools

import jax
import jax.numpy as jnp
import numpy as np
from jax import lax
from jax.experimental import pallas as pl
from jax.experimental.pallas import tpu as pltpu


_BLOCK_BYTES = 2 * 1024 * 1024      # ~2 MiB input blocks: >=85% of HBM roofline
_VMEM_LIMIT = 32 * 1024 * 1024      # safe on all generations (v7x physical = 64 MiB)


def _plan_tiles(G, C, S, itemsize):
    """Pick (tg, ts, s_pad) so x3 (G, C, s_pad) is read in ~_BLOCK_BYTES blocks.

    Returns tg | G, ts | s_pad, s_pad >= S (host zero-pad only for awkward S).
    """
    slab = C * S * itemsize                      # bytes of one full-g slab
    if slab <= _BLOCK_BYTES:
        # Whole spatial extent per g fits: block over G instead (review item 1).
        want = max(1, min(_BLOCK_BYTES // max(slab, 1), G, 4096))
        tg = 1
        for d in range(want, 0, -1):             # largest divisor of G <= want
            if G % d == 0:
                tg = d
                break
        return tg, S, S
    # S is large: tile the lane axis; keep tg = 1.
    max_ts = max(128, (_BLOCK_BYTES // (C * itemsize)) // 128 * 128)
    ts_hi = min((S // 128) * 128, max_ts)
    for ts in range(ts_hi, 127, -128):           # largest 128-multiple divisor of S
        if S % ts == 0:
            return 1, ts, S
    # No bounded 128-multiple divisor: zero-pad S on the host so a bounded tile
    # divides it, instead of taking a full-S block that can blow past VMEM.
    ts = max_ts
    s_pad = ((S + ts - 1) // ts) * ts
    return 1, ts, s_pad


def _cov_kernel(x_ref, p_ref):
    """One grid step: p = sum_{tg, s} x[tg, :, s] x[tg, :, s]^T  (a (C, C) Gram partial).

    x_ref: (tg, C, ts) block (f32 or bf16).  p_ref: (C, C) f32 partial (own block
    per grid step -> no in-grid reduction, both grid axes fully parallel).
    """
    p_ref[...] = jnp.zeros_like(p_ref)

    @pl.loop(0, x_ref.shape[0])
    def _(i):
        xi = x_ref[i].astype(jnp.float32)                     # (C, ts)
        # Contract the lane (s) axis of both operands -> (C, C), f32 accumulation,
        # no explicit transpose materialized.
        p_ref[...] += lax.dot_general(
            xi, xi, (((1,), (1,)), ((), ())),
            preferred_element_type=jnp.float32)


def _attn_kernel(a_ref, x_ref, o_ref, *, approx_sigmoid):
    """One grid step: o[tg] = sigmoid(A @ x[tg]) for every g row in the block.

    a_ref: (C, C) f32 (kept f32 for accuracy).  x_ref/o_ref: (tg, C, ts),
    lane-dense stores (ts is a 128 multiple or the full S extent).
    """
    a = a_ref[...]                                            # hoisted out of the loop

    @pl.loop(0, x_ref.shape[0])
    def _(i):
        xi = x_ref[i].astype(jnp.float32)                     # (C, ts)
        att = jnp.dot(a, xi, preferred_element_type=jnp.float32)
        e = jnp.exp(-att)                                     # EUP
        if approx_sigmoid:
            # v7x: keep the divide on the EUP's free slot; ~1e-3-level accuracy.
            o = pl.reciprocal(1.0 + e, approx=True)
        else:
            o = 1.0 / (1.0 + e)
        o_ref[i] = o.astype(o_ref.dtype)


@functools.partial(jax.jit, static_argnums=(3,),
                   static_argnames=("approx_sigmoid", "native_layout"))
def self_attention_forward(x_hat, weight, bias, n_heads, *,
                           approx_sigmoid=False, native_layout=False):
    """Pallas implementation of SelfAttention.forward.

    x_hat  : (s0, s1, s2, s3, s4), s2 == in_channels.  Streamed in its own dtype
             (pass bf16 in only if the producer already emits bf16).
    weight : (in_channels * n_heads, in_channels)   (torch nn.Linear layout)
    bias   : (in_channels * n_heads,)
    approx_sigmoid : use the approximate EUP reciprocal for the sigmoid (v7x).
    native_layout  : return the lane-dense (G, C, S) result and skip the final
                     XLA permutation into the torch output layout.
    """
    s0, s1, s2, s3, s4 = x_hat.shape
    C, H = int(s2), int(n_heads)
    G, S = s0 * s1, s3 * s4
    M = G * S
    isz = jnp.dtype(x_hat.dtype).itemsize

    # Free adjacent-dim merge (s0,s1)->G, (s3,s4)->S; x3[g, c, s] == X[g*S+s, c].
    x3 = x_hat.reshape(G, C, S)

    tg, ts, s_pad = _plan_tiles(G, C, S, isz)
    if s_pad != S:
        x3 = jnp.pad(x3, ((0, 0), (0, 0), (0, s_pad - S)))    # zeros: exact for pass 1
    ng, nt = G // tg, s_pad // ts

    # ---- pass 1: per-block Gram partials (fully parallel; both TCs on v7x) ----
    partials = pl.pallas_call(
        _cov_kernel,
        out_shape=jax.ShapeDtypeStruct((ng, nt, C, C), jnp.float32),
        grid=(ng, nt),
        in_specs=[pl.BlockSpec((tg, C, ts), lambda g, t: (g, 0, t))],
        out_specs=pl.BlockSpec((None, None, C, C), lambda g, t: (g, t, 0, 0)),
        compiler_params=pltpu.CompilerParams(
            dimension_semantics=("parallel", "parallel"),
            vmem_limit_bytes=_VMEM_LIMIT),
        cost_estimate=pl.CostEstimate(
            flops=2 * G * s_pad * C * C,
            transcendentals=0,
            bytes_accessed=G * s_pad * C * isz + ng * nt * C * C * 4),
    )(x3)

    # ---- tiny folded Linear in plain JAX (head mean + both 1/C scales) ----
    cov = jnp.sum(partials, axis=(0, 1))                                      # X^T X
    w_avg = jnp.mean(jnp.asarray(weight, jnp.float32).reshape(C, H, C), axis=1)
    b_avg = jnp.mean(jnp.asarray(bias, jnp.float32).reshape(C, H), axis=1)
    a_mat = (w_avg / (C * C)) @ cov + (b_avg / C)[:, None]                    # (C, C)

    # ---- pass 2: out = sigmoid(A @ X_block); independent lane-dense blocks ----
    kern2 = functools.partial(_attn_kernel, approx_sigmoid=approx_sigmoid)
    out3 = pl.pallas_call(
        kern2,
        out_shape=jax.ShapeDtypeStruct((G, C, s_pad), jnp.float32),
        grid=(ng, nt),
        in_specs=[pl.BlockSpec((C, C), lambda g, t: (0, 0)),          # A (f32)
                  pl.BlockSpec((tg, C, ts), lambda g, t: (g, 0, t))], # X block
        out_specs=pl.BlockSpec((tg, C, ts), lambda g, t: (g, 0, t)),
        compiler_params=pltpu.CompilerParams(
            dimension_semantics=("parallel", "parallel"),
            vmem_limit_bytes=_VMEM_LIMIT),
        cost_estimate=pl.CostEstimate(
            flops=2 * G * s_pad * C * C,
            transcendentals=G * s_pad * C,
            bytes_accessed=G * s_pad * C * (isz + 4) + C * C * 4),
    )(a_mat, x3)

    if s_pad != S:
        out3 = out3[:, :, :S]

    if native_layout:
        return out3        # (G, C, S): lane-dense, preferred layout for consumers

    # Torch output layout (wrapper-side XLA permutation; kept out of the kernel
    # because the final minor dim s4 < 128 would force masked stores).
    out_mc = jnp.swapaxes(out3, 1, 2).reshape(M, C)
    out = out_mc.reshape(s0, s1, s4, 1, -1)
    out = jnp.swapaxes(out, 4, 3)
    out = jnp.swapaxes(out, 3, 2)
    out = jnp.swapaxes(out, 4, 3)
    return out


@functools.partial(jax.jit, static_argnums=(3,))
def self_attention_reference(x_hat, weight, bias, n_heads):
    """Pure-JAX transliteration of the PyTorch forward (for validation)."""
    s = x_hat.shape
    xp = jnp.swapaxes(jnp.swapaxes(x_hat, 2, 3), 3, 4).reshape(-1, s[2])
    cov = (xp.T @ xp) / s[2]
    cov = cov @ weight.T + bias
    att = (xp @ cov) / s[2]
    att = att.reshape(att.shape[0], -1, n_heads).mean(axis=-1)
    att = jax.nn.sigmoid(att)
    att = att.reshape(s[0], s[1], s[4], 1, -1)
    att = jnp.swapaxes(att, 4, 3)
    att = jnp.swapaxes(att, 3, 2)
    att = jnp.swapaxes(att, 4, 3)
    return att


def _run_case(shape, n_heads, x_dtype, approx_sigmoid, atol, rtol, key):
    s0, s1, s2, s3, s4 = shape
    kx, kw, kb = jax.random.split(key, 3)
    x_hat = jax.random.normal(kx, shape, dtype=jnp.float32).astype(x_dtype)
    weight = jax.random.normal(kw, (s2 * n_heads, s2), dtype=jnp.float32) * 0.1
    bias = jax.random.normal(kb, (s2 * n_heads,), dtype=jnp.float32) * 0.1

    out = jax.block_until_ready(
        self_attention_forward(x_hat, weight, bias, n_heads,
                               approx_sigmoid=approx_sigmoid))
    ref = jax.block_until_ready(
        self_attention_reference(x_hat.astype(jnp.float32), weight, bias, n_heads))

    assert out.shape == ref.shape == (s0, s1, s3 * s2, 1, s4), (out.shape, ref.shape)
    np.testing.assert_allclose(np.asarray(out), np.asarray(ref),
                               rtol=rtol, atol=atol)


if __name__ == "__main__":
    k1, k2, k3, k4 = jax.random.split(jax.random.PRNGKey(0), 4)
    # Tolerances: the kernel folds the head mean / 1/C scales into A before the
    # MXU matmuls while the reference follows the per-head torch order, so with
    # TPU DEFAULT matmul precision (bf16 operand truncation) the two paths round
    # differently at the ~1e-3 level; the kernel algebra itself is exact.
    # f32, lane-dense tiles (S = 128), C = 16, 2 heads.
    _run_case((2, 3, 16, 8, 16), 2, jnp.float32, False, 5e-3, 5e-3, k1)
    # f32, small / odd spatial dims (S = 20, full-extent tile), C = 8, 3 heads.
    _run_case((2, 3, 8, 5, 4), 3, jnp.float32, False, 5e-3, 5e-3, k2)
    # bf16 input streamed as-is (no host cast); f32 A / accumulation / sigmoid.
    _run_case((2, 3, 16, 8, 16), 2, jnp.bfloat16, False, 1e-2, 1e-2, k3)
    # v7x-style approximate EUP sigmoid path.
    _run_case((2, 3, 16, 8, 16), 2, jnp.float32, True, 2e-2, 2e-2, k4)
    print("KERNEL_OK")
</pallas_src>

<mosaic_0001>
module attributes {stable_mosaic.version = 11 : i64} {
  func.func @_cov_kernel(%arg0: i32, %arg1: i32, %arg2: memref<6x16x128xf32, #tpu.memory_space<vmem>>, %arg3: memref<1x1x16x16xf32, #tpu.memory_space<vmem>>) attributes {dimension_semantics = [#tpu.dimension_semantics<parallel>, #tpu.dimension_semantics<parallel>], iteration_bounds = array<i64: 1, 1>, scalar_prefetch = 0 : i64, scratch_operands = 0 : i64, tpu.core_type = #tpu.core_type<tc>, window_params = [{transform_indices = @transform_0, window_bounds = array<i64: 6, 16, 128>}, {transform_indices = @transform_1, window_bounds = array<i64: 1, 1, 16, 16>}]} {
    %cst = arith.constant 0.000000e+00 : f32
    %0 = vector.broadcast %cst : f32 to vector<16x16xf32>
    %c0 = arith.constant 0 : index
    %c0_0 = arith.constant 0 : index
    %c0_1 = arith.constant 0 : index
    %c0_2 = arith.constant 0 : index
    %1 = vector.load %arg3[%c0, %c0_0, %c0_1, %c0_2] : memref<1x1x16x16xf32, #tpu.memory_space<vmem>>, vector<1x1x16x16xf32>
    %2 = vector.shape_cast %1 : vector<1x1x16x16xf32> to vector<16x16xf32>
    %3 = vector.shape_cast %0 : vector<16x16xf32> to vector<1x1x16x16xf32>
    tpu.vector_store %arg3[%c0, %c0_0, %c0_1, %c0_2], %3 {strides = array<i32>} : memref<1x1x16x16xf32, #tpu.memory_space<vmem>>, vector<1x1x16x16xf32>,
    %c0_i32 = arith.constant 0 : i32
    %c6_i32 = arith.constant 6 : i32
    %4 = arith.addi %c0_i32, %c6_i32 : i32
    %c1_i32 = arith.constant 1 : i32
    scf.for %arg4 = %c0_i32 to %4 step %c1_i32  : i32 {
      %c1_i32_4 = arith.constant 1 : i32
      %5 = arith.muli %arg4, %c1_i32_4 : i32
      %c0_i32_5 = arith.constant 0 : i32
      %6 = arith.addi %c0_i32_5, %5 : i32
      %7 = arith.index_cast %6 : i32 to index
      %c0_6 = arith.constant 0 : index
      %c0_7 = arith.constant 0 : index
      %8 = vector.load %arg2[%7, %c0_6, %c0_7] : memref<6x16x128xf32, #tpu.memory_space<vmem>>, vector<1x16x128xf32>
      %9 = vector.shape_cast %8 : vector<1x16x128xf32> to vector<16x128xf32>
      %c0_8 = arith.constant 0 : index
      %c0_9 = arith.constant 0 : index
      %c0_10 = arith.constant 0 : index
      %c0_11 = arith.constant 0 : index
      %10 = vector.load %arg3[%c0_8, %c0_9, %c0_10, %c0_11] : memref<1x1x16x16xf32, #tpu.memory_space<vmem>>, vector<1x1x16x16xf32>
      %11 = vector.shape_cast %10 : vector<1x1x16x16xf32> to vector<16x16xf32>
      %cst_12 = arith.constant dense<0.000000e+00> : vector<16x16xf32>
      %12 = tpu.matmul %9, %9, %cst_12 {dimension_numbers = #tpu.dot_dimension_numbers<[1], [1], [0], [0], [0, 0, 1, 0], [], []>} : vector<16x128xf32>, vector<16x128xf32>, vector<16x16xf32> -> vector<16x16xf32>
      %13 = arith.addf %11, %12 : vector<16x16xf32>
      %c0_13 = arith.constant 0 : index
      %c0_14 = arith.constant 0 : index
      %c0_15 = arith.constant 0 : index
      %c0_16 = arith.constant 0 : index
      %14 = vector.load %arg3[%c0_13, %c0_14, %c0_15, %c0_16] : memref<1x1x16x16xf32, #tpu.memory_space<vmem>>, vector<1x1x16x16xf32>
      %15 = vector.shape_cast %14 : vector<1x1x16x16xf32> to vector<16x16xf32>
      %16 = vector.shape_cast %13 : vector<16x16xf32> to vector<1x1x16x16xf32>
      tpu.vector_store %arg3[%c0_13, %c0_14, %c0_15, %c0_16], %16 {strides = array<i32>} : memref<1x1x16x16xf32, #tpu.memory_space<vmem>>, vector<1x1x16x16xf32>,
    }
    %c6_i32_3 = arith.constant 6 : i32
    return
  }
  func.func @transform_0(%arg0: i32, %arg1: i32) -> (i32, i32, i32) {
    %c0_i32 = arith.constant 0 : i32
    %c0_i32_0 = arith.constant 0 : i32
    return %arg0, %c0_i32, %arg1 : i32, i32, i32
  }
  func.func @transform_1(%arg0: i32, %arg1: i32) -> (i32, i32, i32, i32) {
    %c0_i32 = arith.constant 0 : i32
    %c0_i32_0 = arith.constant 0 : i32
    %c0_i32_1 = arith.constant 0 : i32
    return %arg0, %arg1, %c0_i32, %c0_i32_0 : i32, i32, i32, i32
  }
}

module attributes {stable_mosaic.version = 11 : i64} {
  func.func @_attn_kernel(%arg0: i32, %arg1: i32, %arg2: memref<16x16xf32, #tpu.memory_space<vmem>>, %arg3: memref<6x16x128xf32, #tpu.memory_space<vmem>>, %arg4: memref<6x16x128xf32, #tpu.memory_space<vmem>>) attributes {dimension_semantics = [#tpu.dimension_semantics<parallel>, #tpu.dimension_semantics<parallel>], iteration_bounds = array<i64: 1, 1>, scalar_prefetch = 0 : i64, scratch_operands = 0 : i64, tpu.core_type = #tpu.core_type<tc>, window_params = [{pipeline_mode = #tpu.pipeline_mode<synchronous>, transform_indices = @transform_0, window_bounds = array<i64: 16, 16>}, {transform_indices = @transform_1, window_bounds = array<i64: 6, 16, 128>}, {transform_indices = @transform_2, window_bounds = array<i64: 6, 16, 128>}]} {
    %c0 = arith.constant 0 : index
    %c0_0 = arith.constant 0 : index
    %0 = vector.load %arg2[%c0, %c0_0] : memref<16x16xf32, #tpu.memory_space<vmem>>, vector<16x16xf32>
    %c0_i32 = arith.constant 0 : i32
    %c6_i32 = arith.constant 6 : i32
    %1 = arith.addi %c0_i32, %c6_i32 : i32
    %c1_i32 = arith.constant 1 : i32
    scf.for %arg5 = %c0_i32 to %1 step %c1_i32  : i32 {
      %c1_i32_2 = arith.constant 1 : i32
      %2 = arith.muli %arg5, %c1_i32_2 : i32
      %c0_i32_3 = arith.constant 0 : i32
      %3 = arith.addi %c0_i32_3, %2 : i32
      %4 = arith.index_cast %3 : i32 to index
      %c0_4 = arith.constant 0 : index
      %c0_5 = arith.constant 0 : index
      %5 = vector.load %arg3[%4, %c0_4, %c0_5] : memref<6x16x128xf32, #tpu.memory_space<vmem>>, vector<1x16x128xf32>
      %6 = vector.shape_cast %5 : vector<1x16x128xf32> to vector<16x128xf32>
      %cst = arith.constant dense<0.000000e+00> : vector<16x128xf32>
      %7 = tpu.matmul %0, %6, %cst {dimension_numbers = #tpu.dot_dimension_numbers<[1], [0], [0], [1], [0, 0, 1, 1], [], []>} : vector<16x16xf32>, vector<16x128xf32>, vector<16x128xf32> -> vector<16x128xf32>
      %cst_6 = arith.constant 0.000000e+00 : f32
      %8 = vector.broadcast %cst_6 : f32 to vector<16x128xf32>
      %9 = arith.subf %8, %7 : vector<16x128xf32>
      %10 = math.exp %9 : vector<16x128xf32>
      %cst_7 = arith.constant 1.000000e+00 : f32
      %11 = vector.broadcast %cst_7 : f32 to vector<16x128xf32>
      %12 = arith.addf %11, %10 : vector<16x128xf32>
      %cst_8 = arith.constant 1.000000e+00 : f32
      %13 = vector.broadcast %cst_8 : f32 to vector<16x128xf32>
      %14 = arith.divf %13, %12 : vector<16x128xf32>
      %15 = arith.index_cast %3 : i32 to index
      %c0_9 = arith.constant 0 : index
      %c0_10 = arith.constant 0 : index
      %16 = vector.load %arg4[%15, %c0_9, %c0_10] : memref<6x16x128xf32, #tpu.memory_space<vmem>>, vector<1x16x128xf32>
      %17 = vector.shape_cast %16 : vector<1x16x128xf32> to vector<16x128xf32>
      %18 = vector.shape_cast %14 : vector<16x128xf32> to vector<1x16x128xf32>
      tpu.vector_store %arg4[%15, %c0_9, %c0_10], %18 {strides = array<i32>} : memref<6x16x128xf32, #tpu.memory_space<vmem>>, vector<1x16x128xf32>,
    }
    %c6_i32_1 = arith.constant 6 : i32
    return
  }
  func.func @transform_0(%arg0: i32, %arg1: i32) -> (i32, i32) {
    %c0_i32 = arith.constant 0 : i32
    %c0_i32_0 = arith.constant 0 : i32
    %c0_i32_1 = arith.constant 0 : i32
    return %c0_i32, %c0_i32_0 : i32, i32
  }
  func.func @transform_1(%arg0: i32, %arg1: i32) -> (i32, i32, i32) {
    %c0_i32 = arith.constant 0 : i32
    %c0_i32_0 = arith.constant 0 : i32
    return %arg0, %c0_i32, %arg1 : i32, i32, i32
  }
  func.func @transform_2(%arg0: i32, %arg1: i32) -> (i32, i32, i32) {
    %c0_i32 = arith.constant 0 : i32
    %c0_i32_0 = arith.constant 0 : i32
    return %arg0, %c0_i32, %arg1 : i32, i32, i32
  }
}

</mosaic_0001>

<llo_original>
// kernel: self_attention_forward.3
$region0: #{self_attention_forward.3}
  #allocation0 [shape = 'u32[]', space=smem, size = 0x4, offset = 0x4, fixed_abs, tag = 'smem constant byte address 0x4 - core index']
  #allocation1 [shape = 'u32[72,128]{1,0:T(1,128)}', space=vmem, size = 0x9000, scoped, tag = 'internal scratch']
  %s0 = inlined_call_operand.vmem [shape: f32[16,16], index: 0, kind: input, shape index: {}]
  %s1 = inlined_call_operand.vmem [shape: f32[6,16,128], index: 1, kind: input, shape index: {}]
  %s2 = inlined_call_operand.vmem [shape: f32[6,16,128], index: 2, kind: output, shape index: {}]
  %s3 = sld [smem:[#allocation0]]
  $region25: #{self_attention_forward.3} parent=0
    _
  %s5 = ssub.s32 1, %s3
  %s6 = scalar_select 0, %s5, %s3
  // Predicated region
  $region2: #{self_attention_forward.3} parent=0 // pred_check
    _
  $region3: #{self_attention_forward.3} parent=0 // pred_check_branch
    %8 = sbr.rel (0) target = $region5
  $region4: #{self_attention_forward.3} parent=0 // pred_region
    _
  $region5: #{self_attention_forward.3} parent=0 // pred_fallthru
    _
  // Predicated region
  $region6: #{self_attention_forward.3} parent=0 // pred_check
    _
  $region7: #{self_attention_forward.3} parent=0 // pred_check_branch
    %10 = sbr.rel (0) target = $region9
  $region8: #{self_attention_forward.3} parent=0 // pred_region
    _
  $region9: #{self_attention_forward.3} parent=0 // pred_fallthru
    _
  %v11 = vld [vmem:[%s0] sm:$0xff]
  %v12 = vld [vmem:[%s0 + $0x8] sm:$0xff]
  loop: start=0, step=1, limit=6
  $region10: #{self_attention_forward.3} parent=0 // loop_pre_header
    _
  $region11: #{self_attention_forward.3} parent=0 // loop_header
    %s14 = sphi 0, %s18
    %p15 = scmp.ge.s32.totalorder %s14, 6
  $region12: #{self_attention_forward.3} parent=0 // loop_header_branch
    %17 = sbr.rel (%p15) target = $region16
  $region13: #{self_attention_forward.3} parent=0 // loop_body
    %s19 = smul.u32 %s14, 16
    %s20 = scalar_lea.vmem %s1, %s19
    %v21 = vld [vmem:[%s20] sm:$0xff]
    %v22 = vld [vmem:[%s20 + $0x8] sm:$0xff]
    %vm23 = vcmask 130048
    %v25 = vsel %vm23, %v11, 0
    %v28 = vsel %vm23, %v12, 0
    %30 = vmatpush.msra.mxu0 0.0
    %31 = vmatpush.msra.mxu0 0.0
    %32 = vmatpush.msra.mxu0 0.0
    %33 = vmatpush.msra.mxu0 0.0
    %34 = vmatpush.msra.mxu0 0.0
    %35 = vmatpush.msra.mxu0 0.0
    %36 = vmatpush.msra.mxu0 0.0
    %37 = vmatpush.msra.mxu0 0.0
    %38 = vmatpush.msra.mxu0 0.0
    %39 = vmatpush.msra.mxu0 0.0
    %40 = vmatpush.msra.mxu0 0.0
    %41 = vmatpush.msra.mxu0 0.0
    %42 = vmatpush.msra.mxu0 0.0
    %43 = vmatpush.msra.mxu0 0.0
    %44 = vmatpush.msra.mxu0 %v22
    %45 = vmatpush.msra.mxu0 %v21
    %46 = vmatmul.f32.gmra.mxu0 %v25
    %v47 = vpop.f32.mrf.mxu0
    %v48 = vadd.f32 0.0, %v47
    %49 = vmatmul.f32.gmra.mxu0 %v28
    %v50 = vpop.f32.mrf.mxu0
    %v51 = vadd.f32 0.0, %v50
    %52 = vdwg.mxu0
    %v53 = vsub.f32 0.0, %v48
    %v54 = vsub.f32 0.0, %v51
    %v55 = vmul.f32 %v53, 1.442695
    %v56 = vpow.pop %v55
    %v57 = vmul.f32 %v54, 1.442695
    %v58 = vpow.pop %v57
    %v59 = vadd.f32 %v56, 1.0
    %v60 = vadd.f32 %v58, 1.0
    %v61 = vrcp.pop %v59
    %v62 = vmul.f32 %v59, %v61
    %v63 = vsub.f32 1.0, %v62
    %v64 = vmul.f32 %v61, %v63
    %v65 = vadd.f32 %v61, %v64
    %vm66 = vweird.f32 %v59
    %vm67 = vweird.f32 %v61
    %vm68 = vmor %vm66, %vm67
    %v69 = vsel %vm68, %v61, %v65
    %v70 = vand.u32 2147483647, %v59
    %vm71 = vcmp.eq.f32.partialorder %v70, 8.507059e+37
    %v72 = vand.u32 %v59, 2147483648
    %v73 = vor.u32 1.1754944e-38, %v72
    %v74 = vsel %vm71, %v73, %v69
    %v75 = vmul.f32 1.0, %v74
    %v76 = vrcp.pop %v60
    %v77 = vmul.f32 %v60, %v76
    %v78 = vsub.f32 1.0, %v77
    %v79 = vmul.f32 %v76, %v78
    %v80 = vadd.f32 %v76, %v79
    %vm81 = vweird.f32 %v60
    %vm82 = vweird.f32 %v76
    %vm83 = vmor %vm81, %vm82
    %v84 = vsel %vm83, %v76, %v80
    %v85 = vand.u32 2147483647, %v60
    %vm86 = vcmp.eq.f32.partialorder %v85, 8.507059e+37
    %v87 = vand.u32 %v60, 2147483648
    %v88 = vor.u32 1.1754944e-38, %v87
    %v89 = vsel %vm86, %v88, %v84
    %v90 = vmul.f32 1.0, %v89
    %s91 = scalar_lea.vmem %s2, %s19
    %92 = vst [vmem:[%s91] sm:$0xff] %v75
    %93 = vst [vmem:[%s91 + $0x8] sm:$0xff] %v90
  $region14: #{self_attention_forward.3} parent=0 // loop_footer
    %s18 = sadd.s32 1, %s14
  $region15: #{self_attention_forward.3} parent=0 // loop_footer_branch
    %13 = sbr.rel target = $region11
  $region16: #{self_attention_forward.3} parent=0 // loop_exit
    _
  // Predicated region
  $region17: #{self_attention_forward.3} parent=0 // pred_check
    _
  $region18: #{self_attention_forward.3} parent=0 // pred_check_branch
    %95 = sbr.rel (0) target = $region20
  $region19: #{self_attention_forward.3} parent=0 // pred_region
    _
  $region20: #{self_attention_forward.3} parent=0 // pred_fallthru
    _
  // Predicated region
  $region21: #{self_attention_forward.3} parent=0 // pred_check
    _
  $region22: #{self_attention_forward.3} parent=0 // pred_check_branch
    %97 = sbr.rel (0) target = $region24
  $region23: #{self_attention_forward.3} parent=0 // pred_region
    _
  $region24: #{self_attention_forward.3} parent=0 // pred_fallthru
    _

// kernel: self_attention_forward.2
$region0: #{self_attention_forward.2}
  #allocation0 [shape = 'u32[]', space=smem, size = 0x4, offset = 0x4, fixed_abs, tag = 'smem constant byte address 0x4 - core index']
  #allocation1 [shape = 'u32[72,128]{1,0:T(1,128)}', space=vmem, size = 0x9000, scoped, tag = 'internal scratch']
  %s0 = inlined_call_operand.vmem [shape: f32[6,16,128], index: 0, kind: input, shape index: {}]
  %s1 = inlined_call_operand.vmem [shape: f32[1,1,16,16], index: 1, kind: output, shape index: {}]
  %s2 = sld [smem:[#allocation0]]
  $region21: #{self_attention_forward.2} parent=0
    _
  %s4 = ssub.s32 1, %s2
  %s5 = scalar_select 0, %s4, %s2
  // Predicated region
  $region2: #{self_attention_forward.2} parent=0 // pred_check
    _
  $region3: #{self_attention_forward.2} parent=0 // pred_check_branch
    %7 = sbr.rel (0) target = $region5
  $region4: #{self_attention_forward.2} parent=0 // pred_region
    _
  $region5: #{self_attention_forward.2} parent=0 // pred_fallthru
    _
  %vm8 = vcmask 130048
  %9 = vst.msk [vmem:[%s1] sm:$0xff] %vm8, 0.0
  %10 = vst.msk [vmem:[%s1 + $0x8] sm:$0xff] %vm8, 0.0
  loop: start=0, step=1, limit=6
  $region6: #{self_attention_forward.2} parent=0 // loop_pre_header
    _
  $region7: #{self_attention_forward.2} parent=0 // loop_header
    %s12 = sphi 0, %s16
    %p13 = scmp.ge.s32.totalorder %s12, 6
  $region8: #{self_attention_forward.2} parent=0 // loop_header_branch
    %15 = sbr.rel (%p13) target = $region12
  $region9: #{self_attention_forward.2} parent=0 // loop_body
    %s17 = smul.u32 %s12, 16
    %s18 = scalar_lea.vmem %s0, %s17
    %v19 = vld [vmem:[%s18] sm:$0xff]
    %v20 = vld [vmem:[%s18 + $0x8] sm:$0xff]
    %v21 = vld [vmem:[%s1] sm:$0xff]
    %v22 = vld [vmem:[%s1 + $0x8] sm:$0xff]
    %23 = vmatpush.xpose.msra.mxu0 0.0
    %24 = vmatpush.xpose.msra.mxu0 0.0
    %25 = vmatpush.xpose.msra.mxu0 0.0
    %26 = vmatpush.xpose.msra.mxu0 0.0
    %27 = vmatpush.xpose.msra.mxu0 0.0
    %28 = vmatpush.xpose.msra.mxu0 0.0
    %29 = vmatpush.xpose.msra.mxu0 0.0
    %30 = vmatpush.xpose.msra.mxu0 0.0
    %31 = vmatpush.xpose.msra.mxu0 0.0
    %32 = vmatpush.xpose.msra.mxu0 0.0
    %33 = vmatpush.xpose.msra.mxu0 0.0
    %34 = vmatpush.xpose.msra.mxu0 0.0
    %35 = vmatpush.xpose.msra.mxu0 0.0
    %36 = vmatpush.xpose.msra.mxu0 0.0
    %37 = vmatpush.xpose.msra.mxu0 %v20
    %38 = vmatpush.xpose.msra.mxu0 %v19
    %39 = vmatmul.f32.gmra.mxu0 %v19
    %v40 = vpop.f32.mrf.mxu0
    %v41 = vadd.f32 0.0, %v40
    %42 = vmatmul.f32.gmra.mxu0 %v20
    %v43 = vpop.f32.mrf.mxu0
    %v44 = vadd.f32 0.0, %v43
    %45 = vdwg.mxu0
    %v46 = vadd.f32 %v21, %v41
    %v47 = vadd.f32 %v22, %v44
    %48 = vst.msk [vmem:[%s1] sm:$0xff] %vm8, %v46
    %49 = vst.msk [vmem:[%s1 + $0x8] sm:$0xff] %vm8, %v47
  $region10: #{self_attention_forward.2} parent=0 // loop_footer
    %s16 = sadd.s32 1, %s12
  $region11: #{self_attention_forward.2} parent=0 // loop_footer_branch
    %11 = sbr.rel target = $region7
  $region12: #{self_attention_forward.2} parent=0 // loop_exit
    _
  // Predicated region
  $region13: #{self_attention_forward.2} parent=0 // pred_check
    _
  $region14: #{self_attention_forward.2} parent=0 // pred_check_branch
    %51 = sbr.rel (0) target = $region16
  $region15: #{self_attention_forward.2} parent=0 // pred_region
    _
  $region16: #{self_attention_forward.2} parent=0 // pred_fallthru
    _
  // Predicated region
  $region17: #{self_attention_forward.2} parent=0 // pred_check
    _
  $region18: #{self_attention_forward.2} parent=0 // pred_check_branch
    %53 = sbr.rel (0) target = $region20
  $region19: #{self_attention_forward.2} parent=0 // pred_region
    _
  $region20: #{self_attention_forward.2} parent=0 // pred_fallthru
    _

</llo_original>
